<compile_context>
chip_gen: v5e
topology: v5e:2x2
jax: 0.10.0
libtpu: 0.0.40
codegen_flags: <defaults>
</compile_context>

<pallas_src>
import jax
import jax.numpy as jnp
import numpy as np
from jax.experimental import pallas as pl
from jax.experimental.pallas import tpu as pltpu

INPUT_SIZE = 2
HIDDEN_SIZE = 64
OUTPUT_SIZE = 4
OUT_PAD = 128  # lane-dense padded output width


def _lstm_fc_kernel(xproj_ref, whh_ref, wfc_ref, bfc_ref, out_ref):
    """LSTM recurrence (input projection pre-hoisted) + final Linear.

    xproj_ref : (T, B, 4H)  precomputed x@W_ih^T + (b_ih+b_hh), gates [i,f,o,g]
    whh_ref   : (H, 4H)     W_hh^T, gate-reordered to [i,f,o,g]
    wfc_ref   : (H, Opad)   W_fc^T, zero-padded to 128 lanes
    bfc_ref   : (1, Opad)
    out_ref   : (B, Opad)
    """
    T = xproj_ref.shape[0]
    B = xproj_ref.shape[1]
    H = whh_ref.shape[0]

    whh_t = whh_ref[...]                       # (H, 4H), resident in vregs

    h = jnp.zeros((B, H), jnp.float32)
    c = jnp.zeros((B, H), jnp.float32)

    # Fully unrolled recurrence: per step only one MXU matmul + gate math sits
    # on the serial dependence chain.
    for t in range(T):
        gates = xproj_ref[t] + jnp.dot(h, whh_t,
                                       preferred_element_type=jnp.float32)
        # gate layout (columns): [i | f | o | g]
        sig = jax.nn.sigmoid(gates[:, :3 * H])   # one EUP pass over i,f,o
        g_g = jnp.tanh(gates[:, 3 * H:])         # one EUP pass over g
        i_g = sig[:, 0 * H:1 * H]
        f_g = sig[:, 1 * H:2 * H]
        o_g = sig[:, 2 * H:3 * H]
        c = f_g * c + i_g * g_g
        h = o_g * jnp.tanh(c)

    # Final Linear on the last hidden state (lane-padded, unmasked store).
    out_ref[...] = (jnp.dot(h, wfc_ref[...],
                            preferred_element_type=jnp.float32)
                    + bfc_ref[...]).astype(out_ref.dtype)


def _reorder_gates(w):
    """Permute PyTorch gate blocks [i, f, g, o] -> [i, f, o, g] along axis 0."""
    i, f, g, o = jnp.split(w, 4, axis=0)
    return jnp.concatenate([i, f, o, g], axis=0)


def io_model_forward(x, params):
    """x: (B, T, I) float32. Returns (B, O) float32."""
    w_ih, w_hh, b_ih, b_hh, w_fc, b_fc = params
    B, T, I = x.shape
    H = w_hh.shape[1]
    O = w_fc.shape[0]

    # Gate-reorder so sigmoid gates are contiguous in the lane dimension.
    w_ih_r = _reorder_gates(w_ih)            # (4H, I)
    w_hh_r = _reorder_gates(w_hh)            # (4H, H)
    b_r = _reorder_gates(b_ih + b_hh)        # (4H,)

    # Hoist the input projection out of the recurrence: one matmul for all
    # timesteps, bias folded in. Done in XLA; trace-time layout work is free.
    x_tm = jnp.transpose(x, (1, 0, 2))                               # (T, B, I)
    xproj = (x_tm.reshape(T * B, I) @ w_ih_r.T + b_r).reshape(T, B, 4 * H)

    # Pre-transpose recurrent / FC weights; lane-pad FC to 128.
    whh_t = w_hh_r.T                                                 # (H, 4H)
    wfc_t = jnp.zeros((H, OUT_PAD), jnp.float32).at[:, :O].set(w_fc.T)
    bfc_p = jnp.zeros((1, OUT_PAD), jnp.float32).at[:, :O].set(b_fc)

    vmem = pl.BlockSpec(memory_space=pltpu.MemorySpace.VMEM)
    out_pad = pl.pallas_call(
        _lstm_fc_kernel,
        out_shape=jax.ShapeDtypeStruct((B, OUT_PAD), jnp.float32),
        in_specs=[vmem] * 4,
        out_specs=vmem,
    )(xproj, whh_t, wfc_t, bfc_p)
    return out_pad[:, :O]


def init_params(key, input_size=INPUT_SIZE, hidden_size=HIDDEN_SIZE,
                output_size=OUTPUT_SIZE):
    """Deterministic init mirroring PyTorch default ranges (uniform +-1/sqrt(fan))."""
    ks = jax.random.split(key, 6)
    k_lstm = 1.0 / np.sqrt(hidden_size)
    k_fc = 1.0 / np.sqrt(hidden_size)
    w_ih = jax.random.uniform(ks[0], (4 * hidden_size, input_size),
                              jnp.float32, -k_lstm, k_lstm)
    w_hh = jax.random.uniform(ks[1], (4 * hidden_size, hidden_size),
                              jnp.float32, -k_lstm, k_lstm)
    b_ih = jax.random.uniform(ks[2], (4 * hidden_size,), jnp.float32,
                              -k_lstm, k_lstm)
    b_hh = jax.random.uniform(ks[3], (4 * hidden_size,), jnp.float32,
                              -k_lstm, k_lstm)
    w_fc = jax.random.uniform(ks[4], (output_size, hidden_size), jnp.float32,
                              -k_fc, k_fc)
    b_fc = jax.random.uniform(ks[5], (output_size,), jnp.float32, -k_fc, k_fc)
    return (w_ih, w_hh, b_ih, b_hh, w_fc, b_fc)


def _reference_forward(x, params):
    """Pure-JAX reference of the PyTorch semantics (gate order i,f,g,o)."""
    w_ih, w_hh, b_ih, b_hh, w_fc, b_fc = params
    B, T, I = x.shape
    H = w_hh.shape[1]
    h = jnp.zeros((B, H), jnp.float32)
    c = jnp.zeros((B, H), jnp.float32)
    for t in range(T):
        gates = x[:, t, :] @ w_ih.T + b_ih + h @ w_hh.T + b_hh
        i_g = jax.nn.sigmoid(gates[:, 0 * H:1 * H])
        f_g = jax.nn.sigmoid(gates[:, 1 * H:2 * H])
        g_g = jnp.tanh(gates[:, 2 * H:3 * H])
        o_g = jax.nn.sigmoid(gates[:, 3 * H:4 * H])
        c = f_g * c + i_g * g_g
        h = o_g * jnp.tanh(c)
    return h @ w_fc.T + b_fc


if __name__ == "__main__":
    key = jax.random.PRNGKey(0)
    k_x, k_p = jax.random.split(key)

    B, T = 2, 8                       # batch=2, seq=8, input_size=2
    x = jax.random.normal(k_x, (B, T, INPUT_SIZE), jnp.float32)
    params = init_params(k_p)

    out = io_model_forward(x, params)
    out = jax.block_until_ready(out)

    ref = _reference_forward(x, params)
    np.testing.assert_allclose(np.asarray(out), np.asarray(ref),
                               rtol=1e-5, atol=1e-5)

    assert out.shape == (B, OUTPUT_SIZE)
    print("KERNEL_OK")
</pallas_src>

<mosaic_0001>
module attributes {stable_mosaic.version = 11 : i64} {
  func.func @_lstm_fc_kernel(%arg0: memref<8x2x256xf32, #tpu.memory_space<vmem>>, %arg1: memref<64x256xf32, #tpu.memory_space<vmem>>, %arg2: memref<64x128xf32, #tpu.memory_space<vmem>>, %arg3: memref<1x128xf32, #tpu.memory_space<vmem>>, %arg4: memref<2x128xf32, #tpu.memory_space<vmem>>) attributes {dimension_semantics = [], scalar_prefetch = 0 : i64, scratch_operands = 0 : i64, tpu.core_type = #tpu.core_type<tc>} {
    %c0 = arith.constant 0 : index
    %c0_0 = arith.constant 0 : index
    %0 = vector.load %arg1[%c0, %c0_0] : memref<64x256xf32, #tpu.memory_space<vmem>>, vector<64x256xf32>
    %cst = arith.constant 0.000000e+00 : f32
    %1 = vector.broadcast %cst : f32 to vector<2x64xf32>
    %cst_1 = arith.constant 0.000000e+00 : f32
    %2 = vector.broadcast %cst_1 : f32 to vector<2x64xf32>
    %c0_2 = arith.constant 0 : index
    %c0_3 = arith.constant 0 : index
    %c0_4 = arith.constant 0 : index
    %3 = vector.load %arg0[%c0_2, %c0_3, %c0_4] : memref<8x2x256xf32, #tpu.memory_space<vmem>>, vector<1x2x256xf32>
    %4 = vector.shape_cast %3 : vector<1x2x256xf32> to vector<2x256xf32>
    %cst_5 = arith.constant dense<0.000000e+00> : vector<2x256xf32>
    %5 = tpu.matmul %1, %0, %cst_5 {dimension_numbers = #tpu.dot_dimension_numbers<[1], [0], [0], [1], [0, 0, 1, 1], [], []>} : vector<2x64xf32>, vector<64x256xf32>, vector<2x256xf32> -> vector<2x256xf32>
    %6 = arith.addf %4, %5 : vector<2x256xf32>
    %7 = vector.extract_strided_slice %6 {offsets = [0, 0], sizes = [2, 192], strides = [1, 1]} : vector<2x256xf32> to vector<2x192xf32>
    %8 = arith.negf %7 : vector<2x192xf32>
    %9 = math.exp %8 : vector<2x192xf32>
    %cst_6 = arith.constant 1.000000e+00 : f32
    %10 = vector.broadcast %cst_6 : f32 to vector<2x192xf32>
    %11 = arith.addf %10, %9 : vector<2x192xf32>
    %12 = arith.divf %10, %11 : vector<2x192xf32>
    %13 = vector.extract_strided_slice %6 {offsets = [0, 192], sizes = [2, 64], strides = [1, 1]} : vector<2x256xf32> to vector<2x64xf32>
    %14 = math.tanh %13 : vector<2x64xf32>
    %15 = vector.extract_strided_slice %12 {offsets = [0, 0], sizes = [2, 64], strides = [1, 1]} : vector<2x192xf32> to vector<2x64xf32>
    %16 = vector.extract_strided_slice %12 {offsets = [0, 64], sizes = [2, 64], strides = [1, 1]} : vector<2x192xf32> to vector<2x64xf32>
    %17 = vector.extract_strided_slice %12 {offsets = [0, 128], sizes = [2, 64], strides = [1, 1]} : vector<2x192xf32> to vector<2x64xf32>
    %18 = arith.mulf %16, %2 : vector<2x64xf32>
    %19 = arith.mulf %15, %14 : vector<2x64xf32>
    %20 = arith.addf %18, %19 : vector<2x64xf32>
    %21 = math.tanh %20 : vector<2x64xf32>
    %22 = arith.mulf %17, %21 : vector<2x64xf32>
    %c1 = arith.constant 1 : index
    %c0_7 = arith.constant 0 : index
    %c0_8 = arith.constant 0 : index
    %23 = vector.load %arg0[%c1, %c0_7, %c0_8] : memref<8x2x256xf32, #tpu.memory_space<vmem>>, vector<1x2x256xf32>
    %24 = vector.shape_cast %23 : vector<1x2x256xf32> to vector<2x256xf32>
    %cst_9 = arith.constant dense<0.000000e+00> : vector<2x256xf32>
    %25 = tpu.matmul %22, %0, %cst_9 {dimension_numbers = #tpu.dot_dimension_numbers<[1], [0], [0], [1], [0, 0, 1, 1], [], []>} : vector<2x64xf32>, vector<64x256xf32>, vector<2x256xf32> -> vector<2x256xf32>
    %26 = arith.addf %24, %25 : vector<2x256xf32>
    %27 = vector.extract_strided_slice %26 {offsets = [0, 0], sizes = [2, 192], strides = [1, 1]} : vector<2x256xf32> to vector<2x192xf32>
    %28 = arith.negf %27 : vector<2x192xf32>
    %29 = math.exp %28 : vector<2x192xf32>
    %cst_10 = arith.constant 1.000000e+00 : f32
    %30 = vector.broadcast %cst_10 : f32 to vector<2x192xf32>
    %31 = arith.addf %30, %29 : vector<2x192xf32>
    %32 = arith.divf %30, %31 : vector<2x192xf32>
    %33 = vector.extract_strided_slice %26 {offsets = [0, 192], sizes = [2, 64], strides = [1, 1]} : vector<2x256xf32> to vector<2x64xf32>
    %34 = math.tanh %33 : vector<2x64xf32>
    %35 = vector.extract_strided_slice %32 {offsets = [0, 0], sizes = [2, 64], strides = [1, 1]} : vector<2x192xf32> to vector<2x64xf32>
    %36 = vector.extract_strided_slice %32 {offsets = [0, 64], sizes = [2, 64], strides = [1, 1]} : vector<2x192xf32> to vector<2x64xf32>
    %37 = vector.extract_strided_slice %32 {offsets = [0, 128], sizes = [2, 64], strides = [1, 1]} : vector<2x192xf32> to vector<2x64xf32>
    %38 = arith.mulf %36, %20 : vector<2x64xf32>
    %39 = arith.mulf %35, %34 : vector<2x64xf32>
    %40 = arith.addf %38, %39 : vector<2x64xf32>
    %41 = math.tanh %40 : vector<2x64xf32>
    %42 = arith.mulf %37, %41 : vector<2x64xf32>
    %c2 = arith.constant 2 : index
    %c0_11 = arith.constant 0 : index
    %c0_12 = arith.constant 0 : index
    %43 = vector.load %arg0[%c2, %c0_11, %c0_12] : memref<8x2x256xf32, #tpu.memory_space<vmem>>, vector<1x2x256xf32>
    %44 = vector.shape_cast %43 : vector<1x2x256xf32> to vector<2x256xf32>
    %cst_13 = arith.constant dense<0.000000e+00> : vector<2x256xf32>
    %45 = tpu.matmul %42, %0, %cst_13 {dimension_numbers = #tpu.dot_dimension_numbers<[1], [0], [0], [1], [0, 0, 1, 1], [], []>} : vector<2x64xf32>, vector<64x256xf32>, vector<2x256xf32> -> vector<2x256xf32>
    %46 = arith.addf %44, %45 : vector<2x256xf32>
    %47 = vector.extract_strided_slice %46 {offsets = [0, 0], sizes = [2, 192], strides = [1, 1]} : vector<2x256xf32> to vector<2x192xf32>
    %48 = arith.negf %47 : vector<2x192xf32>
    %49 = math.exp %48 : vector<2x192xf32>
    %cst_14 = arith.constant 1.000000e+00 : f32
    %50 = vector.broadcast %cst_14 : f32 to vector<2x192xf32>
    %51 = arith.addf %50, %49 : vector<2x192xf32>
    %52 = arith.divf %50, %51 : vector<2x192xf32>
    %53 = vector.extract_strided_slice %46 {offsets = [0, 192], sizes = [2, 64], strides = [1, 1]} : vector<2x256xf32> to vector<2x64xf32>
    %54 = math.tanh %53 : vector<2x64xf32>
    %55 = vector.extract_strided_slice %52 {offsets = [0, 0], sizes = [2, 64], strides = [1, 1]} : vector<2x192xf32> to vector<2x64xf32>
    %56 = vector.extract_strided_slice %52 {offsets = [0, 64], sizes = [2, 64], strides = [1, 1]} : vector<2x192xf32> to vector<2x64xf32>
    %57 = vector.extract_strided_slice %52 {offsets = [0, 128], sizes = [2, 64], strides = [1, 1]} : vector<2x192xf32> to vector<2x64xf32>
    %58 = arith.mulf %56, %40 : vector<2x64xf32>
    %59 = arith.mulf %55, %54 : vector<2x64xf32>
    %60 = arith.addf %58, %59 : vector<2x64xf32>
    %61 = math.tanh %60 : vector<2x64xf32>
    %62 = arith.mulf %57, %61 : vector<2x64xf32>
    %c3 = arith.constant 3 : index
    %c0_15 = arith.constant 0 : index
    %c0_16 = arith.constant 0 : index
    %63 = vector.load %arg0[%c3, %c0_15, %c0_16] : memref<8x2x256xf32, #tpu.memory_space<vmem>>, vector<1x2x256xf32>
    %64 = vector.shape_cast %63 : vector<1x2x256xf32> to vector<2x256xf32>
    %cst_17 = arith.constant dense<0.000000e+00> : vector<2x256xf32>
    %65 = tpu.matmul %62, %0, %cst_17 {dimension_numbers = #tpu.dot_dimension_numbers<[1], [0], [0], [1], [0, 0, 1, 1], [], []>} : vector<2x64xf32>, vector<64x256xf32>, vector<2x256xf32> -> vector<2x256xf32>
    %66 = arith.addf %64, %65 : vector<2x256xf32>
    %67 = vector.extract_strided_slice %66 {offsets = [0, 0], sizes = [2, 192], strides = [1, 1]} : vector<2x256xf32> to vector<2x192xf32>
    %68 = arith.negf %67 : vector<2x192xf32>
    %69 = math.exp %68 : vector<2x192xf32>
    %cst_18 = arith.constant 1.000000e+00 : f32
    %70 = vector.broadcast %cst_18 : f32 to vector<2x192xf32>
    %71 = arith.addf %70, %69 : vector<2x192xf32>
    %72 = arith.divf %70, %71 : vector<2x192xf32>
    %73 = vector.extract_strided_slice %66 {offsets = [0, 192], sizes = [2, 64], strides = [1, 1]} : vector<2x256xf32> to vector<2x64xf32>
    %74 = math.tanh %73 : vector<2x64xf32>
    %75 = vector.extract_strided_slice %72 {offsets = [0, 0], sizes = [2, 64], strides = [1, 1]} : vector<2x192xf32> to vector<2x64xf32>
    %76 = vector.extract_strided_slice %72 {offsets = [0, 64], sizes = [2, 64], strides = [1, 1]} : vector<2x192xf32> to vector<2x64xf32>
    %77 = vector.extract_strided_slice %72 {offsets = [0, 128], sizes = [2, 64], strides = [1, 1]} : vector<2x192xf32> to vector<2x64xf32>
    %78 = arith.mulf %76, %60 : vector<2x64xf32>
    %79 = arith.mulf %75, %74 : vector<2x64xf32>
    %80 = arith.addf %78, %79 : vector<2x64xf32>
    %81 = math.tanh %80 : vector<2x64xf32>
    %82 = arith.mulf %77, %81 : vector<2x64xf32>
    %c4 = arith.constant 4 : index
    %c0_19 = arith.constant 0 : index
    %c0_20 = arith.constant 0 : index
    %83 = vector.load %arg0[%c4, %c0_19, %c0_20] : memref<8x2x256xf32, #tpu.memory_space<vmem>>, vector<1x2x256xf32>
    %84 = vector.shape_cast %83 : vector<1x2x256xf32> to vector<2x256xf32>
    %cst_21 = arith.constant dense<0.000000e+00> : vector<2x256xf32>
    %85 = tpu.matmul %82, %0, %cst_21 {dimension_numbers = #tpu.dot_dimension_numbers<[1], [0], [0], [1], [0, 0, 1, 1], [], []>} : vector<2x64xf32>, vector<64x256xf32>, vector<2x256xf32> -> vector<2x256xf32>
    %86 = arith.addf %84, %85 : vector<2x256xf32>
    %87 = vector.extract_strided_slice %86 {offsets = [0, 0], sizes = [2, 192], strides = [1, 1]} : vector<2x256xf32> to vector<2x192xf32>
    %88 = arith.negf %87 : vector<2x192xf32>
    %89 = math.exp %88 : vector<2x192xf32>
    %cst_22 = arith.constant 1.000000e+00 : f32
    %90 = vector.broadcast %cst_22 : f32 to vector<2x192xf32>
    %91 = arith.addf %90, %89 : vector<2x192xf32>
    %92 = arith.divf %90, %91 : vector<2x192xf32>
    %93 = vector.extract_strided_slice %86 {offsets = [0, 192], sizes = [2, 64], strides = [1, 1]} : vector<2x256xf32> to vector<2x64xf32>
    %94 = math.tanh %93 : vector<2x64xf32>
    %95 = vector.extract_strided_slice %92 {offsets = [0, 0], sizes = [2, 64], strides = [1, 1]} : vector<2x192xf32> to vector<2x64xf32>
    %96 = vector.extract_strided_slice %92 {offsets = [0, 64], sizes = [2, 64], strides = [1, 1]} : vector<2x192xf32> to vector<2x64xf32>
    %97 = vector.extract_strided_slice %92 {offsets = [0, 128], sizes = [2, 64], strides = [1, 1]} : vector<2x192xf32> to vector<2x64xf32>
    %98 = arith.mulf %96, %80 : vector<2x64xf32>
    %99 = arith.mulf %95, %94 : vector<2x64xf32>
    %100 = arith.addf %98, %99 : vector<2x64xf32>
    %101 = math.tanh %100 : vector<2x64xf32>
    %102 = arith.mulf %97, %101 : vector<2x64xf32>
    %c5 = arith.constant 5 : index
    %c0_23 = arith.constant 0 : index
    %c0_24 = arith.constant 0 : index
    %103 = vector.load %arg0[%c5, %c0_23, %c0_24] : memref<8x2x256xf32, #tpu.memory_space<vmem>>, vector<1x2x256xf32>
    %104 = vector.shape_cast %103 : vector<1x2x256xf32> to vector<2x256xf32>
    %cst_25 = arith.constant dense<0.000000e+00> : vector<2x256xf32>
    %105 = tpu.matmul %102, %0, %cst_25 {dimension_numbers = #tpu.dot_dimension_numbers<[1], [0], [0], [1], [0, 0, 1, 1], [], []>} : vector<2x64xf32>, vector<64x256xf32>, vector<2x256xf32> -> vector<2x256xf32>
    %106 = arith.addf %104, %105 : vector<2x256xf32>
    %107 = vector.extract_strided_slice %106 {offsets = [0, 0], sizes = [2, 192], strides = [1, 1]} : vector<2x256xf32> to vector<2x192xf32>
    %108 = arith.negf %107 : vector<2x192xf32>
    %109 = math.exp %108 : vector<2x192xf32>
    %cst_26 = arith.constant 1.000000e+00 : f32
    %110 = vector.broadcast %cst_26 : f32 to vector<2x192xf32>
    %111 = arith.addf %110, %109 : vector<2x192xf32>
    %112 = arith.divf %110, %111 : vector<2x192xf32>
    %113 = vector.extract_strided_slice %106 {offsets = [0, 192], sizes = [2, 64], strides = [1, 1]} : vector<2x256xf32> to vector<2x64xf32>
    %114 = math.tanh %113 : vector<2x64xf32>
    %115 = vector.extract_strided_slice %112 {offsets = [0, 0], sizes = [2, 64], strides = [1, 1]} : vector<2x192xf32> to vector<2x64xf32>
    %116 = vector.extract_strided_slice %112 {offsets = [0, 64], sizes = [2, 64], strides = [1, 1]} : vector<2x192xf32> to vector<2x64xf32>
    %117 = vector.extract_strided_slice %112 {offsets = [0, 128], sizes = [2, 64], strides = [1, 1]} : vector<2x192xf32> to vector<2x64xf32>
    %118 = arith.mulf %116, %100 : vector<2x64xf32>
    %119 = arith.mulf %115, %114 : vector<2x64xf32>
    %120 = arith.addf %118, %119 : vector<2x64xf32>
    %121 = math.tanh %120 : vector<2x64xf32>
    %122 = arith.mulf %117, %121 : vector<2x64xf32>
    %c6 = arith.constant 6 : index
    %c0_27 = arith.constant 0 : index
    %c0_28 = arith.constant 0 : index
    %123 = vector.load %arg0[%c6, %c0_27, %c0_28] : memref<8x2x256xf32, #tpu.memory_space<vmem>>, vector<1x2x256xf32>
    %124 = vector.shape_cast %123 : vector<1x2x256xf32> to vector<2x256xf32>
    %cst_29 = arith.constant dense<0.000000e+00> : vector<2x256xf32>
    %125 = tpu.matmul %122, %0, %cst_29 {dimension_numbers = #tpu.dot_dimension_numbers<[1], [0], [0], [1], [0, 0, 1, 1], [], []>} : vector<2x64xf32>, vector<64x256xf32>, vector<2x256xf32> -> vector<2x256xf32>
    %126 = arith.addf %124, %125 : vector<2x256xf32>
    %127 = vector.extract_strided_slice %126 {offsets = [0, 0], sizes = [2, 192], strides = [1, 1]} : vector<2x256xf32> to vector<2x192xf32>
    %128 = arith.negf %127 : vector<2x192xf32>
    %129 = math.exp %128 : vector<2x192xf32>
    %cst_30 = arith.constant 1.000000e+00 : f32
    %130 = vector.broadcast %cst_30 : f32 to vector<2x192xf32>
    %131 = arith.addf %130, %129 : vector<2x192xf32>
    %132 = arith.divf %130, %131 : vector<2x192xf32>
    %133 = vector.extract_strided_slice %126 {offsets = [0, 192], sizes = [2, 64], strides = [1, 1]} : vector<2x256xf32> to vector<2x64xf32>
    %134 = math.tanh %133 : vector<2x64xf32>
    %135 = vector.extract_strided_slice %132 {offsets = [0, 0], sizes = [2, 64], strides = [1, 1]} : vector<2x192xf32> to vector<2x64xf32>
    %136 = vector.extract_strided_slice %132 {offsets = [0, 64], sizes = [2, 64], strides = [1, 1]} : vector<2x192xf32> to vector<2x64xf32>
    %137 = vector.extract_strided_slice %132 {offsets = [0, 128], sizes = [2, 64], strides = [1, 1]} : vector<2x192xf32> to vector<2x64xf32>
    %138 = arith.mulf %136, %120 : vector<2x64xf32>
    %139 = arith.mulf %135, %134 : vector<2x64xf32>
    %140 = arith.addf %138, %139 : vector<2x64xf32>
    %141 = math.tanh %140 : vector<2x64xf32>
    %142 = arith.mulf %137, %141 : vector<2x64xf32>
    %c7 = arith.constant 7 : index
    %c0_31 = arith.constant 0 : index
    %c0_32 = arith.constant 0 : index
    %143 = vector.load %arg0[%c7, %c0_31, %c0_32] : memref<8x2x256xf32, #tpu.memory_space<vmem>>, vector<1x2x256xf32>
    %144 = vector.shape_cast %143 : vector<1x2x256xf32> to vector<2x256xf32>
    %cst_33 = arith.constant dense<0.000000e+00> : vector<2x256xf32>
    %145 = tpu.matmul %142, %0, %cst_33 {dimension_numbers = #tpu.dot_dimension_numbers<[1], [0], [0], [1], [0, 0, 1, 1], [], []>} : vector<2x64xf32>, vector<64x256xf32>, vector<2x256xf32> -> vector<2x256xf32>
    %146 = arith.addf %144, %145 : vector<2x256xf32>
    %147 = vector.extract_strided_slice %146 {offsets = [0, 0], sizes = [2, 192], strides = [1, 1]} : vector<2x256xf32> to vector<2x192xf32>
    %148 = arith.negf %147 : vector<2x192xf32>
    %149 = math.exp %148 : vector<2x192xf32>
    %cst_34 = arith.constant 1.000000e+00 : f32
    %150 = vector.broadcast %cst_34 : f32 to vector<2x192xf32>
    %151 = arith.addf %150, %149 : vector<2x192xf32>
    %152 = arith.divf %150, %151 : vector<2x192xf32>
    %153 = vector.extract_strided_slice %146 {offsets = [0, 192], sizes = [2, 64], strides = [1, 1]} : vector<2x256xf32> to vector<2x64xf32>
    %154 = math.tanh %153 : vector<2x64xf32>
    %155 = vector.extract_strided_slice %152 {offsets = [0, 0], sizes = [2, 64], strides = [1, 1]} : vector<2x192xf32> to vector<2x64xf32>
    %156 = vector.extract_strided_slice %152 {offsets = [0, 64], sizes = [2, 64], strides = [1, 1]} : vector<2x192xf32> to vector<2x64xf32>
    %157 = vector.extract_strided_slice %152 {offsets = [0, 128], sizes = [2, 64], strides = [1, 1]} : vector<2x192xf32> to vector<2x64xf32>
    %158 = arith.mulf %156, %140 : vector<2x64xf32>
    %159 = arith.mulf %155, %154 : vector<2x64xf32>
    %160 = arith.addf %158, %159 : vector<2x64xf32>
    %161 = math.tanh %160 : vector<2x64xf32>
    %162 = arith.mulf %157, %161 : vector<2x64xf32>
    %c0_35 = arith.constant 0 : index
    %c0_36 = arith.constant 0 : index
    %163 = vector.load %arg2[%c0_35, %c0_36] : memref<64x128xf32, #tpu.memory_space<vmem>>, vector<64x128xf32>
    %cst_37 = arith.constant dense<0.000000e+00> : vector<2x128xf32>
    %164 = tpu.matmul %162, %163, %cst_37 {dimension_numbers = #tpu.dot_dimension_numbers<[1], [0], [0], [1], [0, 0, 1, 1], [], []>} : vector<2x64xf32>, vector<64x128xf32>, vector<2x128xf32> -> vector<2x128xf32>
    %c0_38 = arith.constant 0 : index
    %c0_39 = arith.constant 0 : index
    %165 = vector.load %arg3[%c0_38, %c0_39] : memref<1x128xf32, #tpu.memory_space<vmem>>, vector<1x128xf32>
    %166 = vector.broadcast %165 : vector<1x128xf32> to vector<2x128xf32>
    %167 = arith.addf %164, %166 : vector<2x128xf32>
    %c0_40 = arith.constant 0 : index
    %c0_41 = arith.constant 0 : index
    %168 = vector.load %arg4[%c0_40, %c0_41] : memref<2x128xf32, #tpu.memory_space<vmem>>, vector<2x128xf32>
    tpu.vector_store %arg4[%c0_40, %c0_41], %167 {strides = array<i32>} : memref<2x128xf32, #tpu.memory_space<vmem>>, vector<2x128xf32>,
    return
  }
}

</mosaic_0001>

<llo_original>
// kernel: tpu_custom_call.1
$region0: #{tpu_custom_call.1}
  #allocation0 [shape = 'u32[]', space=smem, size = 0x4, offset = 0x4, fixed_abs, tag = 'smem constant byte address 0x4 - core index']
  #allocation1 [shape = 'u32[72,128]{1,0:T(1,128)}', space=vmem, size = 0x9000, scoped, tag = 'internal scratch']
  %s0 = inlined_call_operand.hbm [shape: f32[8,2,256], index: 0, kind: input, shape index: {}]
  %s1 = inlined_call_operand.hbm [shape: f32[64,256], index: 1, kind: input, shape index: {}]
  %s2 = inlined_call_operand.hbm [shape: f32[64,128], index: 2, kind: input, shape index: {}]
  %s3 = inlined_call_operand.vmem [shape: f32[1,128], index: 3, kind: input, shape index: {}]
  %s4 = inlined_call_operand.hbm [shape: f32[2,128], index: 4, kind: output, shape index: {}]
  %s5 = sld [smem:[#allocation0]]
  $region38: #{tpu_custom_call.1} parent=0
    _
  %s7 = ssub.s32 1, %s5
  %s8 = scalar_select 0, %s7, %s5
  $region1: #{tpu_custom_call.1} parent=0
    #allocation2 [shape = 'u8[16384]{0}', space=vmem, size = 0x4000, scoped, tag = 'input window, operand 0, single buffered']
    #allocation3 [shape = 's32[1]{0}', space=sflag, size = 0x4, scoped, tag = 'scoped memory for tpu_custom_call.1']
    #allocation4 [shape = 's32[1]{0}', space=sflag, size = 0x4, scoped, tag = 'scoped memory for tpu_custom_call.1']
    #allocation5 [shape = 'u8[65536]{0}', space=vmem, size = 0x10000, scoped, tag = 'input window, operand 1, single buffered']
    #allocation6 [shape = 's32[1]{0}', space=sflag, size = 0x4, scoped, tag = 'scoped memory for tpu_custom_call.1']
    #allocation7 [shape = 'u8[32768]{0}', space=vmem, size = 0x8000, scoped, tag = 'input window, operand 2, single buffered']
    #allocation8 [shape = 'u8[1024]{0}', space=vmem, size = 0x400, scoped, tag = 'output window, operand 0, single buffered']
    %9 = vsyncpa [#allocation3], 0
    %10 = vsyncpa [#allocation6], 0
    %11 = vsyncpa [#allocation4], 0
    // Predicated region
    $region2: #{tpu_custom_call.1} parent=1 // pred_check
      _
    $region3: #{tpu_custom_call.1} parent=1 // pred_check_branch
      %13 = sbr.rel (0) target = $region5
    $region4: #{tpu_custom_call.1} parent=1 // pred_region
      %15 = vsyncadd [#allocation3], 0
      %s16 = sshll.u32 %s0, 4
      %s17 = int_to_ptr.hbm [resolvable:$true] %s16
      %s18 = sshll.u32 [#allocation2], 4
      %s19 = int_to_ptr.vmem [resolvable:$true] %s18
      %24 = dma.hbm_to_vmem [thread:$0]  %s17, 512, %s19, [#allocation3], 64, 64, 4
    $region5: #{tpu_custom_call.1} parent=1 // pred_fallthru
      _
    // Predicated region
    $region6: #{tpu_custom_call.1} parent=1 // pred_check
      _
    $region7: #{tpu_custom_call.1} parent=1 // pred_check_branch
      %26 = sbr.rel (0) target = $region9
    $region8: #{tpu_custom_call.1} parent=1 // pred_region
      %28 = vsyncadd [#allocation6], 0
      %s29 = sshll.u32 %s1, 4
      %s30 = int_to_ptr.hbm [resolvable:$true] %s29
      %s31 = sshll.u32 [#allocation5], 4
      %s32 = int_to_ptr.vmem [resolvable:$true] %s31
      %37 = dma.hbm_to_vmem [thread:$0]  %s30, 2048, %s32, [#allocation6], 256, 256, 16
    $region9: #{tpu_custom_call.1} parent=1 // pred_fallthru
      _
    // Predicated region
    $region10: #{tpu_custom_call.1} parent=1 // pred_check
      _
    $region11: #{tpu_custom_call.1} parent=1 // pred_check_branch
      %39 = sbr.rel (0) target = $region13
    $region12: #{tpu_custom_call.1} parent=1 // pred_region
      %41 = vsyncadd [#allocation6], 0
      %s42 = sshll.u32 %s2, 4
      %s43 = int_to_ptr.hbm [resolvable:$true] %s42
      %s44 = sshll.u32 [#allocation7], 4
      %s45 = int_to_ptr.vmem [resolvable:$true] %s44
      %50 = dma.hbm_to_vmem [thread:$0]  %s43, 1024, %s45, [#allocation6], 128, 128, 8
    $region13: #{tpu_custom_call.1} parent=1 // pred_fallthru
      _
    // Predicated region
    $region14: #{tpu_custom_call.1} parent=1 // pred_check
      _
    $region15: #{tpu_custom_call.1} parent=1 // pred_check_branch
      %52 = sbr.rel (0) target = $region17
    $region16: #{tpu_custom_call.1} parent=1 // pred_region
      _
    $region17: #{tpu_custom_call.1} parent=1 // pred_fallthru
      _
    // Predicated region
    $region18: #{tpu_custom_call.1} parent=1 // pred_check
      _
    $region19: #{tpu_custom_call.1} parent=1 // pred_check_branch
      %54 = sbr.rel (0) target = $region21
    $region20: #{tpu_custom_call.1} parent=1 // pred_region
      %56 = dma.done [#allocation3], 512
    $region21: #{tpu_custom_call.1} parent=1 // pred_fallthru
      _
    // Predicated region
    $region22: #{tpu_custom_call.1} parent=1 // pred_check
      _
    $region23: #{tpu_custom_call.1} parent=1 // pred_check_branch
      %58 = sbr.rel (0) target = $region25
    $region24: #{tpu_custom_call.1} parent=1 // pred_region
      %60 = dma.done [#allocation6], 2048
    $region25: #{tpu_custom_call.1} parent=1 // pred_fallthru
      _
    // Predicated region
    $region26: #{tpu_custom_call.1} parent=1 // pred_check
      _
    $region27: #{tpu_custom_call.1} parent=1 // pred_check_branch
      %62 = sbr.rel (0) target = $region29
    $region28: #{tpu_custom_call.1} parent=1 // pred_region
      %64 = dma.done [#allocation6], 1024
    $region29: #{tpu_custom_call.1} parent=1 // pred_fallthru
      _
    %v65 = vld [vmem:[#allocation5] sm:$0xff]
    %v66 = vld [vmem:[#allocation5 + $0x8] sm:$0xff]
    %v67 = vld [vmem:[#allocation5 + $0x10] sm:$0xff]
    %v68 = vld [vmem:[#allocation5 + $0x18] sm:$0xff]
    %v69 = vld [vmem:[#allocation5 + $0x20] sm:$0xff]
    %v70 = vld [vmem:[#allocation5 + $0x28] sm:$0xff]
    %v71 = vld [vmem:[#allocation5 + $0x30] sm:$0xff]
    %v72 = vld [vmem:[#allocation5 + $0x38] sm:$0xff]
    %v73 = vld [vmem:[#allocation5 + $0x40] sm:$0xff]
    %v74 = vld [vmem:[#allocation5 + $0x48] sm:$0xff]
    %v75 = vld [vmem:[#allocation5 + $0x50] sm:$0xff]
    %v76 = vld [vmem:[#allocation5 + $0x58] sm:$0xff]
    %v77 = vld [vmem:[#allocation5 + $0x60] sm:$0xff]
    %v78 = vld [vmem:[#allocation5 + $0x68] sm:$0xff]
    %v79 = vld [vmem:[#allocation5 + $0x70] sm:$0xff]
    %v80 = vld [vmem:[#allocation5 + $0x78] sm:$0xff]
    %v81 = vld [vmem:[#allocation2] sm:$0xf]
    %vm82 = vcmask 523264
    %v84 = vsel %vm82, 0.0, 0
    %86 = vmatpush.msra.mxu0 0.0
    %87 = vmatpush.msra.mxu0 0.0
    %88 = vmatpush.msra.mxu0 0.0
    %89 = vmatpush.msra.mxu0 0.0
    %90 = vmatpush.msra.mxu0 0.0
    %91 = vmatpush.msra.mxu0 0.0
    %92 = vmatpush.msra.mxu0 0.0
    %93 = vmatpush.msra.mxu0 0.0
    %94 = vmatpush.msra.mxu0 %v79
    %95 = vmatpush.msra.mxu0 %v77
    %96 = vmatpush.msra.mxu0 %v75
    %97 = vmatpush.msra.mxu0 %v73
    %98 = vmatpush.msra.mxu0 %v71
    %99 = vmatpush.msra.mxu0 %v69
    %100 = vmatpush.msra.mxu0 %v67
    %101 = vmatpush.msra.mxu0 %v65
    %102 = vmatmul.f32.gmra.mxu0 %v84
    %v103 = vpop.f32.mrf.mxu0
    %v104 = vadd.f32 0.0, %v103
    %105 = vdwg.mxu0
    %106 = vmatpush.msra.mxu0 0.0
    %107 = vmatpush.msra.mxu0 0.0
    %108 = vmatpush.msra.mxu0 0.0
    %109 = vmatpush.msra.mxu0 0.0
    %110 = vmatpush.msra.mxu0 0.0
    %111 = vmatpush.msra.mxu0 0.0
    %112 = vmatpush.msra.mxu0 0.0
    %113 = vmatpush.msra.mxu0 0.0
    %114 = vmatpush.msra.mxu0 %v80
    %115 = vmatpush.msra.mxu0 %v78
    %116 = vmatpush.msra.mxu0 %v76
    %117 = vmatpush.msra.mxu0 %v74
    %118 = vmatpush.msra.mxu0 %v72
    %119 = vmatpush.msra.mxu0 %v70
    %120 = vmatpush.msra.mxu0 %v68
    %121 = vmatpush.msra.mxu0 %v66
    %122 = vmatmul.f32.gmra.mxu0 %v84
    %v123 = vpop.f32.mrf.mxu0
    %v124 = vadd.f32 0.0, %v123
    %125 = vdwg.mxu0
    %v128 = vrot.slane %v124, 6
    %vm129 = vcmask 1041408
    %v130 = vsel %vm129, %v104, %v128
    %v132 = vadd.f32 %v81, %v130
    %v133 = vxor.u32 %v132, 2147483648
    %v134 = vmul.f32 %v133, 1.442695
    %v135 = vpow.pop %v134
    %v136 = vadd.f32 %v135, 1.0
    %v137 = vrcp.pop %v136
    %v138 = vmul.f32 %v136, %v137
    %v139 = vsub.f32 1.0, %v138
    %v140 = vmul.f32 %v137, %v139
    %v141 = vadd.f32 %v137, %v140
    %vm142 = vweird.f32 %v136
    %vm143 = vweird.f32 %v137
    %vm144 = vmor %vm142, %vm143
    %v145 = vsel %vm144, %v137, %v141
    %v146 = vand.u32 2147483647, %v136
    %vm147 = vcmp.eq.f32.partialorder %v146, 8.507059e+37
    %v148 = vand.u32 %v136, 2147483648
    %v149 = vor.u32 1.1754944e-38, %v148
    %v150 = vsel %vm147, %v149, %v145
    %v151 = vmul.f32 1.0, %v150
    %153 = vrot.lane.b32.xlu0 %v132, 64
    %v154 = vpop.permute.xlu0 %153
    %v155 = vrot.slane %v154, 2
    %v157 = vtanh.pop %v155
    %v158 = vmul.f32 %v151, 0.0
    %v159 = vmul.f32 %v151, %v157
    %161 = vrot.lane.b32.xlu0 %v159, 64
    %v162 = vpop.permute.xlu0 %161
    %v164 = vadd.f32 %v158, %v162
    %v165 = vtanh.pop %v164
    %v167 = vrot.slane %v151, 2
    %170 = vrot.lane.b32.xlu0 %v165, 64
    %v171 = vpop.permute.xlu0 %170
    %v173 = vmul.f32 %v167, %v171
    %s174 = scalar_lea.vmem [#allocation2], 4
    %v175 = vld [vmem:[%s174] sm:$0xf]
    %v177 = vsel %vm82, %v173, 0
    %179 = vmatpush.msra.mxu0 0.0
    %180 = vmatpush.msra.mxu0 0.0
    %181 = vmatpush.msra.mxu0 0.0
    %182 = vmatpush.msra.mxu0 0.0
    %183 = vmatpush.msra.mxu0 0.0
    %184 = vmatpush.msra.mxu0 0.0
    %185 = vmatpush.msra.mxu0 0.0
    %186 = vmatpush.msra.mxu0 0.0
    %187 = vmatpush.msra.mxu0 %v79
    %188 = vmatpush.msra.mxu0 %v77
    %189 = vmatpush.msra.mxu0 %v75
    %190 = vmatpush.msra.mxu0 %v73
    %191 = vmatpush.msra.mxu0 %v71
    %192 = vmatpush.msra.mxu0 %v69
    %193 = vmatpush.msra.mxu0 %v67
    %194 = vmatpush.msra.mxu0 %v65
    %195 = vmatmul.f32.gmra.mxu0 %v177
    %v196 = vpop.f32.mrf.mxu0
    %v197 = vadd.f32 0.0, %v196
    %198 = vdwg.mxu0
    %199 = vmatpush.msra.mxu0 0.0
    %200 = vmatpush.msra.mxu0 0.0
    %201 = vmatpush.msra.mxu0 0.0
    %202 = vmatpush.msra.mxu0 0.0
    %203 = vmatpush.msra.mxu0 0.0
    %204 = vmatpush.msra.mxu0 0.0
    %205 = vmatpush.msra.mxu0 0.0
    %206 = vmatpush.msra.mxu0 0.0
    %207 = vmatpush.msra.mxu0 %v80
    %208 = vmatpush.msra.mxu0 %v78
    %209 = vmatpush.msra.mxu0 %v76
    %210 = vmatpush.msra.mxu0 %v74
    %211 = vmatpush.msra.mxu0 %v72
    %212 = vmatpush.msra.mxu0 %v70
    %213 = vmatpush.msra.mxu0 %v68
    %214 = vmatpush.msra.mxu0 %v66
    %215 = vmatmul.f32.gmra.mxu0 %v177
    %v216 = vpop.f32.mrf.mxu0
    %v217 = vadd.f32 0.0, %v216
    %218 = vdwg.mxu0
    %v221 = vrot.slane %v217, 6
    %v222 = vsel %vm129, %v197, %v221
    %v224 = vadd.f32 %v175, %v222
    %v225 = vxor.u32 %v224, 2147483648
    %v226 = vmul.f32 %v225, 1.442695
    %v227 = vpow.pop %v226
    %v228 = vadd.f32 %v227, 1.0
    %v229 = vrcp.pop %v228
    %v230 = vmul.f32 %v228, %v229
    %v231 = vsub.f32 1.0, %v230
    %v232 = vmul.f32 %v229, %v231
    %v233 = vadd.f32 %v229, %v232
    %vm234 = vweird.f32 %v228
    %vm235 = vweird.f32 %v229
    %vm236 = vmor %vm234, %vm235
    %v237 = vsel %vm236, %v229, %v233
    %v238 = vand.u32 2147483647, %v228
    %vm239 = vcmp.eq.f32.partialorder %v238, 8.507059e+37
    %v240 = vand.u32 %v228, 2147483648
    %v241 = vor.u32 1.1754944e-38, %v240
    %v242 = vsel %vm239, %v241, %v237
    %v243 = vmul.f32 1.0, %v242
    %245 = vrot.lane.b32.xlu0 %v224, 64
    %v246 = vpop.permute.xlu0 %245
    %v247 = vrot.slane %v246, 2
    %v249 = vtanh.pop %v247
    %v250 = vmul.f32 %v243, %v164
    %v251 = vmul.f32 %v243, %v249
    %253 = vrot.lane.b32.xlu0 %v251, 64
    %v254 = vpop.permute.xlu0 %253
    %v256 = vadd.f32 %v250, %v254
    %v257 = vtanh.pop %v256
    %v259 = vrot.slane %v243, 2
    %262 = vrot.lane.b32.xlu0 %v257, 64
    %v263 = vpop.permute.xlu0 %262
    %v265 = vmul.f32 %v259, %v263
    %s266 = scalar_lea.vmem [#allocation2], 8
    %v267 = vld [vmem:[%s266] sm:$0xf]
    %v269 = vsel %vm82, %v265, 0
    %271 = vmatpush.msra.mxu0 0.0
    %272 = vmatpush.msra.mxu0 0.0
    %273 = vmatpush.msra.mxu0 0.0
    %274 = vmatpush.msra.mxu0 0.0
    %275 = vmatpush.msra.mxu0 0.0
    %276 = vmatpush.msra.mxu0 0.0
    %277 = vmatpush.msra.mxu0 0.0
    %278 = vmatpush.msra.mxu0 0.0
    %279 = vmatpush.msra.mxu0 %v79
    %280 = vmatpush.msra.mxu0 %v77
    %281 = vmatpush.msra.mxu0 %v75
    %282 = vmatpush.msra.mxu0 %v73
    %283 = vmatpush.msra.mxu0 %v71
    %284 = vmatpush.msra.mxu0 %v69
    %285 = vmatpush.msra.mxu0 %v67
    %286 = vmatpush.msra.mxu0 %v65
    %287 = vmatmul.f32.gmra.mxu0 %v269
    %v288 = vpop.f32.mrf.mxu0
    %v289 = vadd.f32 0.0, %v288
    %290 = vdwg.mxu0
    %291 = vmatpush.msra.mxu0 0.0
    %292 = vmatpush.msra.mxu0 0.0
    %293 = vmatpush.msra.mxu0 0.0
    %294 = vmatpush.msra.mxu0 0.0
    %295 = vmatpush.msra.mxu0 0.0
    %296 = vmatpush.msra.mxu0 0.0
    %297 = vmatpush.msra.mxu0 0.0
    %298 = vmatpush.msra.mxu0 0.0
    %299 = vmatpush.msra.mxu0 %v80
    %300 = vmatpush.msra.mxu0 %v78
    %301 = vmatpush.msra.mxu0 %v76
    %302 = vmatpush.msra.mxu0 %v74
    %303 = vmatpush.msra.mxu0 %v72
    %304 = vmatpush.msra.mxu0 %v70
    %305 = vmatpush.msra.mxu0 %v68
    %306 = vmatpush.msra.mxu0 %v66
    %307 = vmatmul.f32.gmra.mxu0 %v269
    %v308 = vpop.f32.mrf.mxu0
    %v309 = vadd.f32 0.0, %v308
    %310 = vdwg.mxu0
    %v313 = vrot.slane %v309, 6
    %v314 = vsel %vm129, %v289, %v313
    %v316 = vadd.f32 %v267, %v314
    %v317 = vxor.u32 %v316, 2147483648
    %v318 = vmul.f32 %v317, 1.442695
    %v319 = vpow.pop %v318
    %v320 = vadd.f32 %v319, 1.0
    %v321 = vrcp.pop %v320
    %v322 = vmul.f32 %v320, %v321
    %v323 = vsub.f32 1.0, %v322
    %v324 = vmul.f32 %v321, %v323
    %v325 = vadd.f32 %v321, %v324
    %vm326 = vweird.f32 %v320
    %vm327 = vweird.f32 %v321
    %vm328 = vmor %vm326, %vm327
    %v329 = vsel %vm328, %v321, %v325
    %v330 = vand.u32 2147483647, %v320
    %vm331 = vcmp.eq.f32.partialorder %v330, 8.507059e+37
    %v332 = vand.u32 %v320, 2147483648
    %v333 = vor.u32 1.1754944e-38, %v332
    %v334 = vsel %vm331, %v333, %v329
    %v335 = vmul.f32 1.0, %v334
    %337 = vrot.lane.b32.xlu0 %v316, 64
    %v338 = vpop.permute.xlu0 %337
    %v339 = vrot.slane %v338, 2
    %v341 = vtanh.pop %v339
    %v342 = vmul.f32 %v335, %v256
    %v343 = vmul.f32 %v335, %v341
    %345 = vrot.lane.b32.xlu0 %v343, 64
    %v346 = vpop.permute.xlu0 %345
    %v348 = vadd.f32 %v342, %v346
    %v349 = vtanh.pop %v348
    %v351 = vrot.slane %v335, 2
    %354 = vrot.lane.b32.xlu0 %v349, 64
    %v355 = vpop.permute.xlu0 %354
    %v357 = vmul.f32 %v351, %v355
    %s358 = scalar_lea.vmem [#allocation2], 12
    %v359 = vld [vmem:[%s358] sm:$0xf]
    %v361 = vsel %vm82, %v357, 0
    %363 = vmatpush.msra.mxu0 0.0
    %364 = vmatpush.msra.mxu0 0.0
    %365 = vmatpush.msra.mxu0 0.0
    %366 = vmatpush.msra.mxu0 0.0
    %367 = vmatpush.msra.mxu0 0.0
    %368 = vmatpush.msra.mxu0 0.0
    %369 = vmatpush.msra.mxu0 0.0
    %370 = vmatpush.msra.mxu0 0.0
    %371 = vmatpush.msra.mxu0 %v79
    %372 = vmatpush.msra.mxu0 %v77
    %373 = vmatpush.msra.mxu0 %v75
    %374 = vmatpush.msra.mxu0 %v73
    %375 = vmatpush.msra.mxu0 %v71
    %376 = vmatpush.msra.mxu0 %v69
    %377 = vmatpush.msra.mxu0 %v67
    %378 = vmatpush.msra.mxu0 %v65
    %379 = vmatmul.f32.gmra.mxu0 %v361
    %v380 = vpop.f32.mrf.mxu0
    %v381 = vadd.f32 0.0, %v380
    %382 = vdwg.mxu0
    %383 = vmatpush.msra.mxu0 0.0
    %384 = vmatpush.msra.mxu0 0.0
    %385 = vmatpush.msra.mxu0 0.0
    %386 = vmatpush.msra.mxu0 0.0
    %387 = vmatpush.msra.mxu0 0.0
    %388 = vmatpush.msra.mxu0 0.0
    %389 = vmatpush.msra.mxu0 0.0
    %390 = vmatpush.msra.mxu0 0.0
    %391 = vmatpush.msra.mxu0 %v80
    %392 = vmatpush.msra.mxu0 %v78
    %393 = vmatpush.msra.mxu0 %v76
    %394 = vmatpush.msra.mxu0 %v74
    %395 = vmatpush.msra.mxu0 %v72
    %396 = vmatpush.msra.mxu0 %v70
    %397 = vmatpush.msra.mxu0 %v68
    %398 = vmatpush.msra.mxu0 %v66
    %399 = vmatmul.f32.gmra.mxu0 %v361
    %v400 = vpop.f32.mrf.mxu0
    %v401 = vadd.f32 0.0, %v400
    %402 = vdwg.mxu0
    %v405 = vrot.slane %v401, 6
    %v406 = vsel %vm129, %v381, %v405
    %v408 = vadd.f32 %v359, %v406
    %v409 = vxor.u32 %v408, 2147483648
    %v410 = vmul.f32 %v409, 1.442695
    %v411 = vpow.pop %v410
    %v412 = vadd.f32 %v411, 1.0
    %v413 = vrcp.pop %v412
    %v414 = vmul.f32 %v412, %v413
    %v415 = vsub.f32 1.0, %v414
    %v416 = vmul.f32 %v413, %v415
    %v417 = vadd.f32 %v413, %v416
    %vm418 = vweird.f32 %v412
    %vm419 = vweird.f32 %v413
    %vm420 = vmor %vm418, %vm419
    %v421 = vsel %vm420, %v413, %v417
    %v422 = vand.u32 2147483647, %v412
    %vm423 = vcmp.eq.f32.partialorder %v422, 8.507059e+37
    %v424 = vand.u32 %v412, 2147483648
    %v425 = vor.u32 1.1754944e-38, %v424
    %v426 = vsel %vm423, %v425, %v421
    %v427 = vmul.f32 1.0, %v426
    %429 = vrot.lane.b32.xlu0 %v408, 64
    %v430 = vpop.permute.xlu0 %429
    %v431 = vrot.slane %v430, 2
    %v433 = vtanh.pop %v431
    %v434 = vmul.f32 %v427, %v348
    %v435 = vmul.f32 %v427, %v433
    %437 = vrot.lane.b32.xlu0 %v435, 64
    %v438 = vpop.permute.xlu0 %437
    %v440 = vadd.f32 %v434, %v438
    %v441 = vtanh.pop %v440
    %v443 = vrot.slane %v427, 2
    %446 = vrot.lane.b32.xlu0 %v441, 64
    %v447 = vpop.permute.xlu0 %446
    %v449 = vmul.f32 %v443, %v447
    %s450 = scalar_lea.vmem [#allocation2], 16
    %v451 = vld [vmem:[%s450] sm:$0xf]
    %v453 = vsel %vm82, %v449, 0
    %455 = vmatpush.msra.mxu0 0.0
    %456 = vmatpush.msra.mxu0 0.0
    %457 = vmatpush.msra.mxu0 0.0
    %458 = vmatpush.msra.mxu0 0.0
    %459 = vmatpush.msra.mxu0 0.0
    %460 = vmatpush.msra.mxu0 0.0
    %461 = vmatpush.msra.mxu0 0.0
    %462 = vmatpush.msra.mxu0 0.0
    %463 = vmatpush.msra.mxu0 %v79
    %464 = vmatpush.msra.mxu0 %v77
    %465 = vmatpush.msra.mxu0 %v75
    %466 = vmatpush.msra.mxu0 %v73
    %467 = vmatpush.msra.mxu0 %v71
    %468 = vmatpush.msra.mxu0 %v69
    %469 = vmatpush.msra.mxu0 %v67
    %470 = vmatpush.msra.mxu0 %v65
    %471 = vmatmul.f32.gmra.mxu0 %v453
    %v472 = vpop.f32.mrf.mxu0
    %v473 = vadd.f32 0.0, %v472
    %474 = vdwg.mxu0
    %475 = vmatpush.msra.mxu0 0.0
    %476 = vmatpush.msra.mxu0 0.0
    %477 = vmatpush.msra.mxu0 0.0
    %478 = vmatpush.msra.mxu0 0.0
    %479 = vmatpush.msra.mxu0 0.0
    %480 = vmatpush.msra.mxu0 0.0
    %481 = vmatpush.msra.mxu0 0.0
    %482 = vmatpush.msra.mxu0 0.0
    %483 = vmatpush.msra.mxu0 %v80
    %484 = vmatpush.msra.mxu0 %v78
    %485 = vmatpush.msra.mxu0 %v76
    %486 = vmatpush.msra.mxu0 %v74
    %487 = vmatpush.msra.mxu0 %v72
    %488 = vmatpush.msra.mxu0 %v70
    %489 = vmatpush.msra.mxu0 %v68
    %490 = vmatpush.msra.mxu0 %v66
    %491 = vmatmul.f32.gmra.mxu0 %v453
    %v492 = vpop.f32.mrf.mxu0
    %v493 = vadd.f32 0.0, %v492
    %494 = vdwg.mxu0
    %v497 = vrot.slane %v493, 6
    %v498 = vsel %vm129, %v473, %v497
    %v500 = vadd.f32 %v451, %v498
    %v501 = vxor.u32 %v500, 2147483648
    %v502 = vmul.f32 %v501, 1.442695
    %v503 = vpow.pop %v502
    %v504 = vadd.f32 %v503, 1.0
    %v505 = vrcp.pop %v504
    %v506 = vmul.f32 %v504, %v505
    %v507 = vsub.f32 1.0, %v506
    %v508 = vmul.f32 %v505, %v507
    %v509 = vadd.f32 %v505, %v508
    %vm510 = vweird.f32 %v504
    %vm511 = vweird.f32 %v505
    %vm512 = vmor %vm510, %vm511
    %v513 = vsel %vm512, %v505, %v509
    %v514 = vand.u32 2147483647, %v504
    %vm515 = vcmp.eq.f32.partialorder %v514, 8.507059e+37
    %v516 = vand.u32 %v504, 2147483648
    %v517 = vor.u32 1.1754944e-38, %v516
    %v518 = vsel %vm515, %v517, %v513
    %v519 = vmul.f32 1.0, %v518
    %521 = vrot.lane.b32.xlu0 %v500, 64
    %v522 = vpop.permute.xlu0 %521
    %v523 = vrot.slane %v522, 2
    %v525 = vtanh.pop %v523
    %v526 = vmul.f32 %v519, %v440
    %v527 = vmul.f32 %v519, %v525
    %529 = vrot.lane.b32.xlu0 %v527, 64
    %v530 = vpop.permute.xlu0 %529
    %v532 = vadd.f32 %v526, %v530
    %v533 = vtanh.pop %v532
    %v535 = vrot.slane %v519, 2
    %538 = vrot.lane.b32.xlu0 %v533, 64
    %v539 = vpop.permute.xlu0 %538
    %v541 = vmul.f32 %v535, %v539
    %s542 = scalar_lea.vmem [#allocation2], 20
    %v543 = vld [vmem:[%s542] sm:$0xf]
    %v545 = vsel %vm82, %v541, 0
    %547 = vmatpush.msra.mxu0 0.0
    %548 = vmatpush.msra.mxu0 0.0
    %549 = vmatpush.msra.mxu0 0.0
    %550 = vmatpush.msra.mxu0 0.0
    %551 = vmatpush.msra.mxu0 0.0
    %552 = vmatpush.msra.mxu0 0.0
    %553 = vmatpush.msra.mxu0 0.0
    %554 = vmatpush.msra.mxu0 0.0
    %555 = vmatpush.msra.mxu0 %v79
    %556 = vmatpush.msra.mxu0 %v77
    %557 = vmatpush.msra.mxu0 %v75
    %558 = vmatpush.msra.mxu0 %v73
    %559 = vmatpush.msra.mxu0 %v71
    %560 = vmatpush.msra.mxu0 %v69
    %561 = vmatpush.msra.mxu0 %v67
    %562 = vmatpush.msra.mxu0 %v65
    %563 = vmatmul.f32.gmra.mxu0 %v545
    %v564 = vpop.f32.mrf.mxu0
    %v565 = vadd.f32 0.0, %v564
    %566 = vdwg.mxu0
    %567 = vmatpush.msra.mxu0 0.0
    %568 = vmatpush.msra.mxu0 0.0
    %569 = vmatpush.msra.mxu0 0.0
    %570 = vmatpush.msra.mxu0 0.0
    %571 = vmatpush.msra.mxu0 0.0
    %572 = vmatpush.msra.mxu0 0.0
    %573 = vmatpush.msra.mxu0 0.0
    %574 = vmatpush.msra.mxu0 0.0
    %575 = vmatpush.msra.mxu0 %v80
    %576 = vmatpush.msra.mxu0 %v78
    %577 = vmatpush.msra.mxu0 %v76
    %578 = vmatpush.msra.mxu0 %v74
    %579 = vmatpush.msra.mxu0 %v72
    %580 = vmatpush.msra.mxu0 %v70
    %581 = vmatpush.msra.mxu0 %v68
    %582 = vmatpush.msra.mxu0 %v66
    %583 = vmatmul.f32.gmra.mxu0 %v545
    %v584 = vpop.f32.mrf.mxu0
    %v585 = vadd.f32 0.0, %v584
    %586 = vdwg.mxu0
    %v589 = vrot.slane %v585, 6
    %v590 = vsel %vm129, %v565, %v589
    %v592 = vadd.f32 %v543, %v590
    %v593 = vxor.u32 %v592, 2147483648
    %v594 = vmul.f32 %v593, 1.442695
    %v595 = vpow.pop %v594
    %v596 = vadd.f32 %v595, 1.0
    %v597 = vrcp.pop %v596
    %v598 = vmul.f32 %v596, %v597
    %v599 = vsub.f32 1.0, %v598
    %v600 = vmul.f32 %v597, %v599
    %v601 = vadd.f32 %v597, %v600
    %vm602 = vweird.f32 %v596
    %vm603 = vweird.f32 %v597
    %vm604 = vmor %vm602, %vm603
    %v605 = vsel %vm604, %v597, %v601
    %v606 = vand.u32 2147483647, %v596
    %vm607 = vcmp.eq.f32.partialorder %v606, 8.507059e+37
    %v608 = vand.u32 %v596, 2147483648
    %v609 = vor.u32 1.1754944e-38, %v608
    %v610 = vsel %vm607, %v609, %v605
    %v611 = vmul.f32 1.0, %v610
    %613 = vrot.lane.b32.xlu0 %v592, 64
    %v614 = vpop.permute.xlu0 %613
    %v615 = vrot.slane %v614, 2
    %v617 = vtanh.pop %v615
    %v618 = vmul.f32 %v611, %v532
    %v619 = vmul.f32 %v611, %v617
    %621 = vrot.lane.b32.xlu0 %v619, 64
    %v622 = vpop.permute.xlu0 %621
    %v624 = vadd.f32 %v618, %v622
    %v625 = vtanh.pop %v624
    %v627 = vrot.slane %v611, 2
    %630 = vrot.lane.b32.xlu0 %v625, 64
    %v631 = vpop.permute.xlu0 %630
    %v633 = vmul.f32 %v627, %v631
    %s634 = scalar_lea.vmem [#allocation2], 24
    %v635 = vld [vmem:[%s634] sm:$0xf]
    %v637 = vsel %vm82, %v633, 0
    %639 = vmatpush.msra.mxu0 0.0
    %640 = vmatpush.msra.mxu0 0.0
    %641 = vmatpush.msra.mxu0 0.0
    %642 = vmatpush.msra.mxu0 0.0
    %643 = vmatpush.msra.mxu0 0.0
    %644 = vmatpush.msra.mxu0 0.0
    %645 = vmatpush.msra.mxu0 0.0
    %646 = vmatpush.msra.mxu0 0.0
    %647 = vmatpush.msra.mxu0 %v79
    %648 = vmatpush.msra.mxu0 %v77
    %649 = vmatpush.msra.mxu0 %v75
    %650 = vmatpush.msra.mxu0 %v73
    %651 = vmatpush.msra.mxu0 %v71
    %652 = vmatpush.msra.mxu0 %v69
    %653 = vmatpush.msra.mxu0 %v67
    %654 = vmatpush.msra.mxu0 %v65
    %655 = vmatmul.f32.gmra.mxu0 %v637
    %v656 = vpop.f32.mrf.mxu0
    %v657 = vadd.f32 0.0, %v656
    %658 = vdwg.mxu0
    %659 = vmatpush.msra.mxu0 0.0
    %660 = vmatpush.msra.mxu0 0.0
    %661 = vmatpush.msra.mxu0 0.0
    %662 = vmatpush.msra.mxu0 0.0
    %663 = vmatpush.msra.mxu0 0.0
    %664 = vmatpush.msra.mxu0 0.0
    %665 = vmatpush.msra.mxu0 0.0
    %666 = vmatpush.msra.mxu0 0.0
    %667 = vmatpush.msra.mxu0 %v80
    %668 = vmatpush.msra.mxu0 %v78
    %669 = vmatpush.msra.mxu0 %v76
    %670 = vmatpush.msra.mxu0 %v74
    %671 = vmatpush.msra.mxu0 %v72
    %672 = vmatpush.msra.mxu0 %v70
    %673 = vmatpush.msra.mxu0 %v68
    %674 = vmatpush.msra.mxu0 %v66
    %675 = vmatmul.f32.gmra.mxu0 %v637
    %v676 = vpop.f32.mrf.mxu0
    %v677 = vadd.f32 0.0, %v676
    %678 = vdwg.mxu0
    %v681 = vrot.slane %v677, 6
    %v682 = vsel %vm129, %v657, %v681
    %v684 = vadd.f32 %v635, %v682
    %v685 = vxor.u32 %v684, 2147483648
    %v686 = vmul.f32 %v685, 1.442695
    %v687 = vpow.pop %v686
    %v688 = vadd.f32 %v687, 1.0
    %v689 = vrcp.pop %v688
    %v690 = vmul.f32 %v688, %v689
    %v691 = vsub.f32 1.0, %v690
    %v692 = vmul.f32 %v689, %v691
    %v693 = vadd.f32 %v689, %v692
    %vm694 = vweird.f32 %v688
    %vm695 = vweird.f32 %v689
    %vm696 = vmor %vm694, %vm695
    %v697 = vsel %vm696, %v689, %v693
    %v698 = vand.u32 2147483647, %v688
    %vm699 = vcmp.eq.f32.partialorder %v698, 8.507059e+37
    %v700 = vand.u32 %v688, 2147483648
    %v701 = vor.u32 1.1754944e-38, %v700
    %v702 = vsel %vm699, %v701, %v697
    %v703 = vmul.f32 1.0, %v702
    %705 = vrot.lane.b32.xlu0 %v684, 64
    %v706 = vpop.permute.xlu0 %705
    %v707 = vrot.slane %v706, 2
    %v709 = vtanh.pop %v707
    %v710 = vmul.f32 %v703, %v624
    %v711 = vmul.f32 %v703, %v709
    %713 = vrot.lane.b32.xlu0 %v711, 64
    %v714 = vpop.permute.xlu0 %713
    %v716 = vadd.f32 %v710, %v714
    %v717 = vtanh.pop %v716
    %v719 = vrot.slane %v703, 2
    %722 = vrot.lane.b32.xlu0 %v717, 64
    %v723 = vpop.permute.xlu0 %722
    %v725 = vmul.f32 %v719, %v723
    %s726 = scalar_lea.vmem [#allocation2], 28
    %v727 = vld [vmem:[%s726] sm:$0xf]
    %v729 = vsel %vm82, %v725, 0
    %731 = vmatpush.msra.mxu0 0.0
    %732 = vmatpush.msra.mxu0 0.0
    %733 = vmatpush.msra.mxu0 0.0
    %734 = vmatpush.msra.mxu0 0.0
    %735 = vmatpush.msra.mxu0 0.0
    %736 = vmatpush.msra.mxu0 0.0
    %737 = vmatpush.msra.mxu0 0.0
    %738 = vmatpush.msra.mxu0 0.0
    %739 = vmatpush.msra.mxu0 %v79
    %740 = vmatpush.msra.mxu0 %v77
    %741 = vmatpush.msra.mxu0 %v75
    %742 = vmatpush.msra.mxu0 %v73
    %743 = vmatpush.msra.mxu0 %v71
    %744 = vmatpush.msra.mxu0 %v69
    %745 = vmatpush.msra.mxu0 %v67
    %746 = vmatpush.msra.mxu0 %v65
    %747 = vmatmul.f32.gmra.mxu0 %v729
    %v748 = vpop.f32.mrf.mxu0
    %v749 = vadd.f32 0.0, %v748
    %750 = vdwg.mxu0
    %751 = vmatpush.msra.mxu0 0.0
    %752 = vmatpush.msra.mxu0 0.0
    %753 = vmatpush.msra.mxu0 0.0
    %754 = vmatpush.msra.mxu0 0.0
    %755 = vmatpush.msra.mxu0 0.0
    %756 = vmatpush.msra.mxu0 0.0
    %757 = vmatpush.msra.mxu0 0.0
    %758 = vmatpush.msra.mxu0 0.0
    %759 = vmatpush.msra.mxu0 %v80
    %760 = vmatpush.msra.mxu0 %v78
    %761 = vmatpush.msra.mxu0 %v76
    %762 = vmatpush.msra.mxu0 %v74
    %763 = vmatpush.msra.mxu0 %v72
    %764 = vmatpush.msra.mxu0 %v70
    %765 = vmatpush.msra.mxu0 %v68
    %766 = vmatpush.msra.mxu0 %v66
    %767 = vmatmul.f32.gmra.mxu0 %v729
    %v768 = vpop.f32.mrf.mxu0
    %v769 = vadd.f32 0.0, %v768
    %770 = vdwg.mxu0
    %v773 = vrot.slane %v769, 6
    %v774 = vsel %vm129, %v749, %v773
    %v776 = vadd.f32 %v727, %v774
    %v777 = vxor.u32 %v776, 2147483648
    %v778 = vmul.f32 %v777, 1.442695
    %v779 = vpow.pop %v778
    %v780 = vadd.f32 %v779, 1.0
    %v781 = vrcp.pop %v780
    %v782 = vmul.f32 %v780, %v781
    %v783 = vsub.f32 1.0, %v782
    %v784 = vmul.f32 %v781, %v783
    %v785 = vadd.f32 %v781, %v784
    %vm786 = vweird.f32 %v780
    %vm787 = vweird.f32 %v781
    %vm788 = vmor %vm786, %vm787
    %v789 = vsel %vm788, %v781, %v785
    %v790 = vand.u32 2147483647, %v780
    %vm791 = vcmp.eq.f32.partialorder %v790, 8.507059e+37
    %v792 = vand.u32 %v780, 2147483648
    %v793 = vor.u32 1.1754944e-38, %v792
    %v794 = vsel %vm791, %v793, %v789
    %v795 = vmul.f32 1.0, %v794
    %797 = vrot.lane.b32.xlu0 %v776, 64
    %v798 = vpop.permute.xlu0 %797
    %v799 = vrot.slane %v798, 2
    %v801 = vtanh.pop %v799
    %v802 = vmul.f32 %v795, %v716
    %v803 = vmul.f32 %v795, %v801
    %805 = vrot.lane.b32.xlu0 %v803, 64
    %v806 = vpop.permute.xlu0 %805
    %v808 = vadd.f32 %v802, %v806
    %v809 = vtanh.pop %v808
    %v811 = vrot.slane %v795, 2
    %814 = vrot.lane.b32.xlu0 %v809, 64
    %v815 = vpop.permute.xlu0 %814
    %v817 = vmul.f32 %v811, %v815
    %v818 = vld [vmem:[#allocation7] sm:$0xff]
    %v819 = vld [vmem:[#allocation7 + $0x8] sm:$0xff]
    %v820 = vld [vmem:[#allocation7 + $0x10] sm:$0xff]
    %v821 = vld [vmem:[#allocation7 + $0x18] sm:$0xff]
    %v822 = vld [vmem:[#allocation7 + $0x20] sm:$0xff]
    %v823 = vld [vmem:[#allocation7 + $0x28] sm:$0xff]
    %v824 = vld [vmem:[#allocation7 + $0x30] sm:$0xff]
    %v825 = vld [vmem:[#allocation7 + $0x38] sm:$0xff]
    %v826 = vld [vmem:[%s3] sm:$0x1]
    %v828 = vperm.slane %v826, 0
    %v831 = vsel %vm82, %v817, 0
    %833 = vmatpush.msra.mxu0 0.0
    %834 = vmatpush.msra.mxu0 0.0
    %835 = vmatpush.msra.mxu0 0.0
    %836 = vmatpush.msra.mxu0 0.0
    %837 = vmatpush.msra.mxu0 0.0
    %838 = vmatpush.msra.mxu0 0.0
    %839 = vmatpush.msra.mxu0 0.0
    %840 = vmatpush.msra.mxu0 0.0
    %841 = vmatpush.msra.mxu0 %v825
    %842 = vmatpush.msra.mxu0 %v824
    %843 = vmatpush.msra.mxu0 %v823
    %844 = vmatpush.msra.mxu0 %v822
    %845 = vmatpush.msra.mxu0 %v821
    %846 = vmatpush.msra.mxu0 %v820
    %847 = vmatpush.msra.mxu0 %v819
    %848 = vmatpush.msra.mxu0 %v818
    %849 = vmatmul.f32.gmra.mxu0 %v831
    %v850 = vpop.f32.mrf.mxu0
    %v851 = vadd.f32 %v828, %v850
    %852 = vdwg.mxu0
    %853 = vst [vmem:[#allocation8] sm:$0x3] %v851
    // Predicated region
    $region30: #{tpu_custom_call.1} parent=1 // pred_check
      _
    $region31: #{tpu_custom_call.1} parent=1 // pred_check_branch
      %855 = sbr.rel (0) target = $region33
    $region32: #{tpu_custom_call.1} parent=1 // pred_region
      %857 = vsyncadd [#allocation4], 0
      %s859 = sshll.u32 [#allocation8], 4
      %s860 = int_to_ptr.vmem [resolvable:$true] %s859
      %s861 = sshll.u32 %s4, 4
      %s862 = int_to_ptr.hbm [resolvable:$true] %s861
      %864 = dma.vmem_to_hbm [thread:$0]  %s860, 32, %s862, [#allocation4]
    $region33: #{tpu_custom_call.1} parent=1 // pred_fallthru
      _
    // Predicated region
    $region34: #{tpu_custom_call.1} parent=1 // pred_check
      _
    $region35: #{tpu_custom_call.1} parent=1 // pred_check_branch
      %866 = sbr.rel (0) target = $region37
    $region36: #{tpu_custom_call.1} parent=1 // pred_region
      %868 = dma.done [#allocation4], 32
    $region37: #{tpu_custom_call.1} parent=1 // pred_fallthru
      _
    %869 = vsyncpa [#allocation3], 1
    %870 = vsyncpa [#allocation6], 1
    %871 = vsyncpa [#allocation4], 1

</llo_original>
